<compile_context>
chip_gen: v7x
topology: tpu7x:2x2x1
jax: 0.10.0
libtpu: 0.0.40
codegen_flags: <defaults>
</compile_context>

<pallas_src>
import functools

import jax
import jax.numpy as jnp
from jax.experimental import pallas as pl
from jax.experimental.pallas import tpu as pltpu


def _round_up(x, m):
    return (x + m - 1) // m * m


def _actor_kernel(x_ref, w_ref, b_ref, o_ref, *, s_pad, c, a_dim, max_action):
    # x: (TB, s_pad) bf16 streamed tile.
    x = x_ref[...]

    # Static, sublane-aligned slices of the packed bf16 weight blob.
    w1 = w_ref[0:s_pad, :]                  # (s_pad, C)
    w2 = w_ref[s_pad:s_pad + c, :]          # (C, C)
    w3 = w_ref[s_pad + c:s_pad + 2 * c, :]  # (C, C)

    b1 = b_ref[0:1, :]                      # (1, C) f32
    b2 = b_ref[1:2, :]
    b3 = b_ref[2:3, :]

    a = jnp.dot(x, w1, preferred_element_type=jnp.float32) + b1
    a = jnp.maximum(a, 0.0)
    a = jnp.dot(a.astype(jnp.bfloat16), w2,
                preferred_element_type=jnp.float32) + b2
    a = jnp.maximum(a, 0.0)
    a = jnp.dot(a.astype(jnp.bfloat16), w3,
                preferred_element_type=jnp.float32) + b3
    # Narrow, useful-payload-only store: only the first a_dim lanes are real.
    o_ref[...] = (max_action * jnp.tanh(a[:, :a_dim])).astype(o_ref.dtype)


def _pack_params(params, state_dim, hdim, action_dim, s_pad, c):
    """Pack (transposed) weights into one bf16 blob and biases into one f32
    blob. Padding is zero so padded lanes/rows contribute exactly 0."""
    w = jnp.zeros((s_pad + 2 * c, c), jnp.float32)
    w = w.at[:state_dim, :hdim].set(params["w1"])
    w = w.at[s_pad:s_pad + hdim, :hdim].set(params["w2"])
    w = w.at[s_pad + c:s_pad + c + hdim, :action_dim].set(params["w3"])
    w = w.astype(jnp.bfloat16)

    b = jnp.zeros((8, c), jnp.float32)
    b = b.at[0, :hdim].set(params["b1"].reshape(-1))
    b = b.at[1, :hdim].set(params["b2"].reshape(-1))
    b = b.at[2, :action_dim].set(params["b3"].reshape(-1))
    return w, b


def actor_forward(state, params, max_action, *, max_block_b=2048):
    """state: [B, state_dim] f32. params: dict of [in, out] weights / [1, out] biases."""
    B, state_dim = state.shape
    hdim = params["w1"].shape[1]
    action_dim = params["w3"].shape[1]

    # Padded geometry: rows 16-aligned (bf16 sublane pack), lanes 128-aligned.
    s_pad = _round_up(state_dim, 16)
    c = _round_up(max(hdim, action_dim), 128)

    w_packed, b_packed = _pack_params(params, state_dim, hdim, action_dim,
                                      s_pad, c)

    # Batch tile: multiple of 16; aim for ~4 grid steps so the pipeline can
    # overlap DMA/compute and v7x megacore gets >= 2 steps to split.
    b16 = _round_up(B, 16)
    tb = _round_up(-(-b16 // 4), 16)             # ~ceil(b16 / 4), 16-aligned
    tb = min(max(tb, min(128, b16)), max_block_b)
    b_pad = _round_up(B, tb)

    # Stream the state in bf16; fold the cast into the pad (skip pad if
    # shapes already conform).
    if b_pad == B and s_pad == state_dim:
        x = state.astype(jnp.bfloat16)
    else:
        x = jnp.zeros((b_pad, s_pad), jnp.bfloat16)
        x = x.at[:B, :state_dim].set(state.astype(jnp.bfloat16))

    grid = (b_pad // tb,)
    kernel = functools.partial(_actor_kernel, s_pad=s_pad, c=c,
                               a_dim=action_dim, max_action=float(max_action))

    out = pl.pallas_call(
        kernel,
        out_shape=jax.ShapeDtypeStruct((b_pad, action_dim), jnp.float32),
        grid_spec=pltpu.PrefetchScalarGridSpec(
            num_scalar_prefetch=0,
            grid=grid,
            in_specs=[
                pl.BlockSpec((tb, s_pad), lambda i: (i, 0)),       # streamed bf16
                pl.BlockSpec(w_packed.shape, lambda i: (0, 0)),    # resident
                pl.BlockSpec(b_packed.shape, lambda i: (0, 0)),    # resident
            ],
            out_specs=pl.BlockSpec((tb, action_dim), lambda i: (i, 0)),
        ),
        compiler_params=pltpu.CompilerParams(
            dimension_semantics=("parallel",)),
    )(x, w_packed, b_packed)

    return out if b_pad == B else out[:B]


def init_actor_params(key, state_dim, action_dim, hdim):
    """Deterministic init mimicking nn.Linear's U(-1/sqrt(fan_in), +) ranges.
    Weights are stored transposed ([in, out]) relative to PyTorch."""
    ks = jax.random.split(key, 6)

    def linear(kw, kb, fan_in, fan_out):
        bound = 1.0 / jnp.sqrt(fan_in)
        w = jax.random.uniform(kw, (fan_in, fan_out), jnp.float32, -bound, bound)
        b = jax.random.uniform(kb, (1, fan_out), jnp.float32, -bound, bound)
        return w, b

    w1, b1 = linear(ks[0], ks[1], state_dim, hdim)
    w2, b2 = linear(ks[2], ks[3], hdim, hdim)
    w3, b3 = linear(ks[4], ks[5], hdim, action_dim)
    return {"w1": w1, "b1": b1, "w2": w2, "b2": b2, "w3": w3, "b3": b3}


def actor_forward_ref(state, params, max_action, weights_dtype=jnp.float32):
    w1 = params["w1"].astype(weights_dtype)
    w2 = params["w2"].astype(weights_dtype)
    w3 = params["w3"].astype(weights_dtype)
    a = jnp.dot(state.astype(weights_dtype), w1,
                preferred_element_type=jnp.float32) + params["b1"]
    a = jnp.maximum(a, 0.0)
    a = jnp.dot(a.astype(weights_dtype), w2,
                preferred_element_type=jnp.float32) + params["b2"]
    a = jnp.maximum(a, 0.0)
    a = jnp.dot(a.astype(weights_dtype), w3,
                preferred_element_type=jnp.float32) + params["b3"]
    return max_action * jnp.tanh(a)


if __name__ == "__main__":
    # Small shapes consistent with the module: batch=2, state_dim=16,
    # hdim=32, action_dim=4, max_action=2.0.
    B, state_dim, hdim, action_dim = 2, 16, 32, 4
    max_action = 2.0

    key = jax.random.PRNGKey(0)
    k_params, k_state = jax.random.split(key)
    params = init_actor_params(k_params, state_dim, action_dim, hdim)
    state = jax.random.normal(k_state, (B, state_dim), jnp.float32)

    out = actor_forward(state, params, max_action)
    out = jax.block_until_ready(out)
    assert out.shape == (B, action_dim)

    # Tight check vs. a reference using the same bf16 weights / f32 accumulation.
    ref_bf16 = actor_forward_ref(state, params, max_action, jnp.bfloat16)
    assert jnp.allclose(out, ref_bf16, atol=1e-3, rtol=1e-3), (out, ref_bf16)

    # Loose sanity check vs. the pure-f32 reference (bf16 weight rounding only).
    ref_f32 = actor_forward_ref(state, params, max_action, jnp.float32)
    assert jnp.allclose(out, ref_f32, atol=5e-2, rtol=5e-2), (out, ref_f32)

    print("KERNEL_OK")
</pallas_src>

<mosaic_0001>
module attributes {stable_mosaic.version = 11 : i64} {
  func.func @_actor_kernel(%arg0: i32, %arg1: memref<16x16xbf16, #tpu.memory_space<vmem>>, %arg2: memref<272x128xbf16, #tpu.memory_space<vmem>>, %arg3: memref<8x128xf32, #tpu.memory_space<vmem>>, %arg4: memref<16x4xf32, #tpu.memory_space<vmem>>) attributes {dimension_semantics = [#tpu.dimension_semantics<parallel>], iteration_bounds = array<i64: 1>, scalar_prefetch = 0 : i64, scratch_operands = 0 : i64, tpu.core_type = #tpu.core_type<tc>, window_params = [{transform_indices = @transform_0, window_bounds = array<i64: 16, 16>}, {pipeline_mode = #tpu.pipeline_mode<synchronous>, transform_indices = @transform_1, window_bounds = array<i64: 272, 128>}, {pipeline_mode = #tpu.pipeline_mode<synchronous>, transform_indices = @transform_2, window_bounds = array<i64: 8, 128>}, {transform_indices = @transform_3, window_bounds = array<i64: 16, 4>}]} {
    %c0 = arith.constant 0 : index
    %c0_0 = arith.constant 0 : index
    %0 = vector.load %arg1[%c0, %c0_0] : memref<16x16xbf16, #tpu.memory_space<vmem>>, vector<16x16xbf16>
    %c0_1 = arith.constant 0 : index
    %c0_2 = arith.constant 0 : index
    %1 = vector.load %arg2[%c0_1, %c0_2] : memref<272x128xbf16, #tpu.memory_space<vmem>>, vector<16x128xbf16>
    %c16 = arith.constant 16 : index
    %c0_3 = arith.constant 0 : index
    %2 = vector.load %arg2[%c16, %c0_3] : memref<272x128xbf16, #tpu.memory_space<vmem>>, vector<128x128xbf16>
    %c144 = arith.constant 144 : index
    %c0_4 = arith.constant 0 : index
    %3 = vector.load %arg2[%c144, %c0_4] : memref<272x128xbf16, #tpu.memory_space<vmem>>, vector<128x128xbf16>
    %c0_5 = arith.constant 0 : index
    %c0_6 = arith.constant 0 : index
    %4 = vector.load %arg3[%c0_5, %c0_6] : memref<8x128xf32, #tpu.memory_space<vmem>>, vector<1x128xf32>
    %c1 = arith.constant 1 : index
    %c0_7 = arith.constant 0 : index
    %5 = vector.load %arg3[%c1, %c0_7] : memref<8x128xf32, #tpu.memory_space<vmem>>, vector<1x128xf32>
    %c2 = arith.constant 2 : index
    %c0_8 = arith.constant 0 : index
    %6 = vector.load %arg3[%c2, %c0_8] : memref<8x128xf32, #tpu.memory_space<vmem>>, vector<1x128xf32>
    %cst = arith.constant dense<0.000000e+00> : vector<16x128xf32>
    %7 = tpu.matmul %0, %1, %cst {dimension_numbers = #tpu.dot_dimension_numbers<[1], [0], [0], [1], [0, 0, 1, 1], [], []>} : vector<16x16xbf16>, vector<16x128xbf16>, vector<16x128xf32> -> vector<16x128xf32>
    %8 = vector.broadcast %4 : vector<1x128xf32> to vector<16x128xf32>
    %9 = arith.addf %7, %8 : vector<16x128xf32>
    %cst_9 = arith.constant 0.000000e+00 : f32
    %10 = vector.broadcast %cst_9 : f32 to vector<16x128xf32>
    %11 = arith.maximumf %9, %10 : vector<16x128xf32>
    %12 = arith.truncf %11 : vector<16x128xf32> to vector<16x128xbf16>
    %cst_10 = arith.constant dense<0.000000e+00> : vector<16x128xf32>
    %13 = tpu.matmul %12, %2, %cst_10 {dimension_numbers = #tpu.dot_dimension_numbers<[1], [0], [0], [1], [0, 0, 1, 1], [], []>} : vector<16x128xbf16>, vector<128x128xbf16>, vector<16x128xf32> -> vector<16x128xf32>
    %14 = vector.broadcast %5 : vector<1x128xf32> to vector<16x128xf32>
    %15 = arith.addf %13, %14 : vector<16x128xf32>
    %cst_11 = arith.constant 0.000000e+00 : f32
    %16 = vector.broadcast %cst_11 : f32 to vector<16x128xf32>
    %17 = arith.maximumf %15, %16 : vector<16x128xf32>
    %18 = arith.truncf %17 : vector<16x128xf32> to vector<16x128xbf16>
    %cst_12 = arith.constant dense<0.000000e+00> : vector<16x128xf32>
    %19 = tpu.matmul %18, %3, %cst_12 {dimension_numbers = #tpu.dot_dimension_numbers<[1], [0], [0], [1], [0, 0, 1, 1], [], []>} : vector<16x128xbf16>, vector<128x128xbf16>, vector<16x128xf32> -> vector<16x128xf32>
    %20 = vector.broadcast %6 : vector<1x128xf32> to vector<16x128xf32>
    %21 = arith.addf %19, %20 : vector<16x128xf32>
    %22 = vector.extract_strided_slice %21 {offsets = [0, 0], sizes = [16, 4], strides = [1, 1]} : vector<16x128xf32> to vector<16x4xf32>
    %23 = math.tanh %22 : vector<16x4xf32>
    %cst_13 = arith.constant 2.000000e+00 : f32
    %24 = vector.broadcast %cst_13 : f32 to vector<16x4xf32>
    %25 = arith.mulf %24, %23 : vector<16x4xf32>
    %c0_14 = arith.constant 0 : index
    %c0_15 = arith.constant 0 : index
    %26 = vector.load %arg4[%c0_14, %c0_15] : memref<16x4xf32, #tpu.memory_space<vmem>>, vector<16x4xf32>
    tpu.vector_store %arg4[%c0_14, %c0_15], %25 {strides = array<i32>} : memref<16x4xf32, #tpu.memory_space<vmem>>, vector<16x4xf32>,
    return
  }
  func.func @transform_0(%arg0: i32) -> (i32, i32) {
    %c0_i32 = arith.constant 0 : i32
    %c0_i32_0 = arith.constant 0 : i32
    return %arg0, %c0_i32 : i32, i32
  }
  func.func @transform_1(%arg0: i32) -> (i32, i32) {
    %c0_i32 = arith.constant 0 : i32
    %c0_i32_0 = arith.constant 0 : i32
    %c0_i32_1 = arith.constant 0 : i32
    return %c0_i32, %c0_i32_0 : i32, i32
  }
  func.func @transform_2(%arg0: i32) -> (i32, i32) {
    %c0_i32 = arith.constant 0 : i32
    %c0_i32_0 = arith.constant 0 : i32
    %c0_i32_1 = arith.constant 0 : i32
    return %c0_i32, %c0_i32_0 : i32, i32
  }
  func.func @transform_3(%arg0: i32) -> (i32, i32) {
    %c0_i32 = arith.constant 0 : i32
    %c0_i32_0 = arith.constant 0 : i32
    return %arg0, %c0_i32 : i32, i32
  }
}

</mosaic_0001>

<llo_original>
// kernel: tpu_custom_call.1
$region0: #{tpu_custom_call.1}
  #allocation0 [shape = 'u32[]', space=smem, size = 0x4, offset = 0x4, fixed_abs, tag = 'smem constant byte address 0x4 - core index']
  #allocation1 [shape = 'u32[144,128]{1,0:T(1,128)}', space=vmem, size = 0x12000, scoped, tag = 'internal scratch']
  %s0 = inlined_call_operand.hbm [shape: bf16[16,16], index: 0, kind: input, shape index: {}]
  %s1 = inlined_call_operand.hbm [shape: bf16[272,128], index: 1, kind: input, shape index: {}]
  %s2 = inlined_call_operand.hbm [shape: f32[8,128], index: 2, kind: input, shape index: {}]
  %s3 = inlined_call_operand.vmem [shape: f32[16,4], index: 3, kind: output, shape index: {}]
  %s4 = sld [smem:[#allocation0]]
  $region34: #{tpu_custom_call.1} parent=0
    _
  %s6 = ssub.s32 1, %s4
  %s7 = scalar_select 0, %s6, %s4
  $region1: #{tpu_custom_call.1} parent=0
    #allocation2 [shape = 'u8[4096]{0}', space=vmem, size = 0x1000, scoped, tag = 'input window, operand 0, single buffered']
    #allocation3 [shape = 's32[1]{0}', space=sflag, size = 0x4, scoped, tag = 'scoped memory for tpu_custom_call.1']
    #allocation4 [shape = 'u8[69632]{0}', space=vmem, size = 0x11000, scoped, tag = 'input window, operand 1, single buffered']
    #allocation5 [shape = 's32[1]{0}', space=sflag, size = 0x4, scoped, tag = 'scoped memory for tpu_custom_call.1']
    #allocation6 [shape = 'u8[4096]{0}', space=vmem, size = 0x1000, scoped, tag = 'input window, operand 2, single buffered']
    %8 = vsyncpa [#allocation3], 0
    %9 = vsyncpa [#allocation5], 0
    // Predicated region
    $region2: #{tpu_custom_call.1} parent=1 // pred_check
      _
    $region3: #{tpu_custom_call.1} parent=1 // pred_check_branch
      %11 = sbr.rel (0) target = $region5
    $region4: #{tpu_custom_call.1} parent=1 // pred_region
      %s13 = ssub.s32 128, 128
      %14 = vsyncadd [#allocation3], %s13
      %s15 = sshll.u32 [#allocation2], 4
      %s16 = int_to_ptr.vmem [resolvable:$true] %s15
      %21 = dma.hbm_to_vmem [thread:$0]  %s0, 128, %s16, [#allocation3], 64, 64, 4
    $region5: #{tpu_custom_call.1} parent=1 // pred_fallthru
      _
    // Predicated region
    $region6: #{tpu_custom_call.1} parent=1 // pred_check
      _
    $region7: #{tpu_custom_call.1} parent=1 // pred_check_branch
      %23 = sbr.rel (0) target = $region9
    $region8: #{tpu_custom_call.1} parent=1 // pred_region
      %s25 = ssub.s32 2176, 2176
      %26 = vsyncadd [#allocation5], %s25
      %s27 = sshll.u32 [#allocation4], 4
      %s28 = int_to_ptr.vmem [resolvable:$true] %s27
      %33 = dma.hbm_to_vmem [thread:$0]  %s1, 2176, %s28, [#allocation5], 64, 64, 4
    $region9: #{tpu_custom_call.1} parent=1 // pred_fallthru
      _
    // Predicated region
    $region10: #{tpu_custom_call.1} parent=1 // pred_check
      _
    $region11: #{tpu_custom_call.1} parent=1 // pred_check_branch
      %35 = sbr.rel (0) target = $region13
    $region12: #{tpu_custom_call.1} parent=1 // pred_region
      %s37 = ssub.s32 128, 128
      %38 = vsyncadd [#allocation5], %s37
      %s40 = sshll.u32 [#allocation6], 4
      %s41 = int_to_ptr.vmem [resolvable:$true] %s40
      %43 = dma.hbm_to_vmem [thread:$0]  %s2, 128, %s41, [#allocation5]
    $region13: #{tpu_custom_call.1} parent=1 // pred_fallthru
      _
    // Predicated region
    $region14: #{tpu_custom_call.1} parent=1 // pred_check
      _
    $region15: #{tpu_custom_call.1} parent=1 // pred_check_branch
      %45 = sbr.rel (0) target = $region17
    $region16: #{tpu_custom_call.1} parent=1 // pred_region
      %46 = dma.done [#allocation3], 128
    $region17: #{tpu_custom_call.1} parent=1 // pred_fallthru
      _
    // Predicated region
    $region18: #{tpu_custom_call.1} parent=1 // pred_check
      _
    $region19: #{tpu_custom_call.1} parent=1 // pred_check_branch
      %48 = sbr.rel (0) target = $region21
    $region20: #{tpu_custom_call.1} parent=1 // pred_region
      %49 = dma.done [#allocation5], 2176
    $region21: #{tpu_custom_call.1} parent=1 // pred_fallthru
      _
    // Predicated region
    $region22: #{tpu_custom_call.1} parent=1 // pred_check
      _
    $region23: #{tpu_custom_call.1} parent=1 // pred_check_branch
      %51 = sbr.rel (0) target = $region25
    $region24: #{tpu_custom_call.1} parent=1 // pred_region
      %52 = dma.done [#allocation5], 128
    $region25: #{tpu_custom_call.1} parent=1 // pred_fallthru
      _
    %v54 = vld [vmem:[#allocation2] sm:$0xf]
    %v55 = vld [vmem:[#allocation2 + $0x4] sm:$0xf]
    %v56 = vld [vmem:[#allocation4] sm:$0xf]
    %v57 = vld [vmem:[#allocation4 + $0x4] sm:$0xf]
    %v58 = vld [vmem:[#allocation4 + $0x8] sm:$0xf]
    %v59 = vld [vmem:[#allocation4 + $0xc] sm:$0xf]
    %v60 = vld [vmem:[#allocation4 + $0x10] sm:$0xf]
    %v61 = vld [vmem:[#allocation4 + $0x14] sm:$0xf]
    %v62 = vld [vmem:[#allocation4 + $0x18] sm:$0xf]
    %v63 = vld [vmem:[#allocation4 + $0x1c] sm:$0xf]
    %v64 = vld [vmem:[#allocation4 + $0x20] sm:$0xf]
    %v65 = vld [vmem:[#allocation4 + $0x24] sm:$0xf]
    %v66 = vld [vmem:[#allocation4 + $0x28] sm:$0xf]
    %v67 = vld [vmem:[#allocation4 + $0x2c] sm:$0xf]
    %v68 = vld [vmem:[#allocation4 + $0x30] sm:$0xf]
    %v69 = vld [vmem:[#allocation4 + $0x34] sm:$0xf]
    %v70 = vld [vmem:[#allocation4 + $0x38] sm:$0xf]
    %v71 = vld [vmem:[#allocation4 + $0x3c] sm:$0xf]
    %v72 = vld [vmem:[#allocation4 + $0x40] sm:$0xf]
    %v73 = vld [vmem:[#allocation4 + $0x44] sm:$0xf]
    %v74 = vld [vmem:[#allocation4 + $0x48] sm:$0xf]
    %v75 = vld [vmem:[#allocation4 + $0x4c] sm:$0xf]
    %v76 = vld [vmem:[#allocation4 + $0x50] sm:$0xf]
    %v77 = vld [vmem:[#allocation4 + $0x54] sm:$0xf]
    %v78 = vld [vmem:[#allocation4 + $0x58] sm:$0xf]
    %v79 = vld [vmem:[#allocation4 + $0x5c] sm:$0xf]
    %v80 = vld [vmem:[#allocation4 + $0x60] sm:$0xf]
    %v81 = vld [vmem:[#allocation4 + $0x64] sm:$0xf]
    %v82 = vld [vmem:[#allocation4 + $0x68] sm:$0xf]
    %v83 = vld [vmem:[#allocation4 + $0x6c] sm:$0xf]
    %v84 = vld [vmem:[#allocation4 + $0x70] sm:$0xf]
    %v85 = vld [vmem:[#allocation4 + $0x74] sm:$0xf]
    %v86 = vld [vmem:[#allocation4 + $0x78] sm:$0xf]
    %v87 = vld [vmem:[#allocation4 + $0x7c] sm:$0xf]
    %v88 = vld [vmem:[#allocation4 + $0x80] sm:$0xf]
    %v89 = vld [vmem:[#allocation4 + $0x84] sm:$0xf]
    %v90 = vld [vmem:[#allocation6] sm:$0x1]
    %v91 = vld [vmem:[#allocation6 + $0x1] sm:$0x1]
    %v92 = vld [vmem:[#allocation6 + $0x2] sm:$0x1]
    %v93 = vlaneseq
    %v94 = vshrl.u32 %v93, 7
    %v95 = vsub.s32 0, %v94
    %v96 = vrot.slane %v90, %v95
    %v99 = vunpack.c.l.b16 %v54
    %v100 = vunpack.c.l.b16 %v55
    %v101 = vpack.c.b16 %v100, %v99
    %v104 = vunpack.c.l.b16 %v56
    %v105 = vunpack.c.l.b16 %v57
    %v106 = vpack.c.b16 %v105, %v104
    %vm108 = vcmask 130048
    %v110 = vsel %vm108, %v101, 0
    %112 = vmatprep.subr.bf16.mxu0 0
    %113 = vmatpush1.bf16.msra.mxu0 %v106
    %114 = vmatprep.subr.bf16.mxu0 0
    %115 = vmatpush1.bf16.msra.mxu0 0
    %116 = vmatprep.subr.bf16.mxu0 0
    %117 = vmatpush1.bf16.msra.mxu0 0
    %118 = vmatprep.subr.bf16.mxu0 0
    %119 = vmatpush1.bf16.msra.mxu0 0
    %120 = vmatprep.subr.bf16.mxu0 0
    %121 = vmatpush1.bf16.msra.mxu0 0
    %122 = vmatprep.subr.bf16.mxu0 0
    %123 = vmatpush1.bf16.msra.mxu0 0
    %124 = vmatprep.subr.bf16.mxu0 0
    %125 = vmatpush1.bf16.msra.mxu0 0
    %126 = vmatprep.subr.bf16.mxu0 0
    %127 = vmatpush1.bf16.msra.mxu0 0
    %128 = vmatprep.subr.bf16.mxu0 0
    %129 = vmatpush1.bf16.msra.mxu0 0
    %130 = vmatprep.subr.bf16.mxu0 0
    %131 = vmatpush1.bf16.msra.mxu0 0
    %132 = vmatprep.subr.bf16.mxu0 0
    %133 = vmatpush1.bf16.msra.mxu0 0
    %134 = vmatprep.subr.bf16.mxu0 0
    %135 = vmatpush1.bf16.msra.mxu0 0
    %136 = vmatprep.subr.bf16.mxu0 0
    %137 = vmatpush1.bf16.msra.mxu0 0
    %138 = vmatprep.subr.bf16.mxu0 0
    %139 = vmatpush1.bf16.msra.mxu0 0
    %140 = vmatprep.subr.bf16.mxu0 0
    %141 = vmatpush1.bf16.msra.mxu0 0
    %142 = vmatprep.subr.bf16.mxu0 0
    %143 = vmatpush1.bf16.msra.mxu0 0
    %144 = vmatprep.mubr.bf16.mxu0 0
    %145 = vmatmul.mubr.bf16.gmra.mrb[0].mxu0 %v110
    %v146 = vpop.f32.mrb[0].mxu0
    %v147 = vadd.f32 %v96, %v146
    %v148 = vpop.f32.mrb[0].mxu0
    %v149 = vpop.f32.mrb[0].mxu0
    %v150 = vadd.f32 %v96, %v149
    %v151 = vpop.f32.mrb[0].mxu0
    %152 = vdwg.mxu0
    %v153 = vmax.f32 %v147, 0.0
    %v154 = vmax.f32 %v150, 0.0
    %v155 = vpack.c.bf16 %v154, %v153
    %v156 = vlaneseq
    %v157 = vshrl.u32 %v156, 7
    %v158 = vsub.s32 0, %v157
    %v159 = vrot.slane %v91, %v158
    %v176 = vunpack.c.l.b16 %v58
    %v177 = vunpack.c.l.b16 %v59
    %v178 = vunpack.c.l.b16 %v60
    %v179 = vunpack.c.l.b16 %v61
    %v180 = vunpack.c.l.b16 %v62
    %v181 = vunpack.c.l.b16 %v63
    %v182 = vunpack.c.l.b16 %v64
    %v183 = vunpack.c.l.b16 %v65
    %v184 = vunpack.c.l.b16 %v66
    %v185 = vunpack.c.l.b16 %v67
    %v186 = vunpack.c.l.b16 %v68
    %v187 = vunpack.c.l.b16 %v69
    %v188 = vunpack.c.l.b16 %v70
    %v189 = vunpack.c.l.b16 %v71
    %v190 = vunpack.c.l.b16 %v72
    %v191 = vunpack.c.l.b16 %v73
    %v192 = vpack.c.b16 %v177, %v176
    %v193 = vpack.c.b16 %v179, %v178
    %v194 = vpack.c.b16 %v181, %v180
    %v195 = vpack.c.b16 %v183, %v182
    %v196 = vpack.c.b16 %v185, %v184
    %v197 = vpack.c.b16 %v187, %v186
    %v198 = vpack.c.b16 %v189, %v188
    %v199 = vpack.c.b16 %v191, %v190
    %208 = vmatprep.subr.bf16.mxu0 0
    %209 = vmatpush1.bf16.msra.mxu0 %v192
    %210 = vmatprep.subr.bf16.mxu0 0
    %211 = vmatpush1.bf16.msra.mxu0 %v193
    %212 = vmatprep.subr.bf16.mxu0 0
    %213 = vmatpush1.bf16.msra.mxu0 %v194
    %214 = vmatprep.subr.bf16.mxu0 0
    %215 = vmatpush1.bf16.msra.mxu0 %v195
    %216 = vmatprep.subr.bf16.mxu0 0
    %217 = vmatpush1.bf16.msra.mxu0 %v196
    %218 = vmatprep.subr.bf16.mxu0 0
    %219 = vmatpush1.bf16.msra.mxu0 %v197
    %220 = vmatprep.subr.bf16.mxu0 0
    %221 = vmatpush1.bf16.msra.mxu0 %v198
    %222 = vmatprep.subr.bf16.mxu0 0
    %223 = vmatpush1.bf16.msra.mxu0 %v199
    %224 = vmatprep.subr.bf16.mxu0 0
    %225 = vmatpush1.bf16.msra.mxu0 0
    %226 = vmatprep.subr.bf16.mxu0 0
    %227 = vmatpush1.bf16.msra.mxu0 0
    %228 = vmatprep.subr.bf16.mxu0 0
    %229 = vmatpush1.bf16.msra.mxu0 0
    %230 = vmatprep.subr.bf16.mxu0 0
    %231 = vmatpush1.bf16.msra.mxu0 0
    %232 = vmatprep.subr.bf16.mxu0 0
    %233 = vmatpush1.bf16.msra.mxu0 0
    %234 = vmatprep.subr.bf16.mxu0 0
    %235 = vmatpush1.bf16.msra.mxu0 0
    %236 = vmatprep.subr.bf16.mxu0 0
    %237 = vmatpush1.bf16.msra.mxu0 0
    %238 = vmatprep.subr.bf16.mxu0 0
    %239 = vmatpush1.bf16.msra.mxu0 0
    %240 = vmatprep.mubr.bf16.mxu0 0
    %241 = vmatmul.mubr.bf16.gmra.mrb[0].mxu0 %v155
    %v242 = vpop.f32.mrb[0].mxu0
    %v243 = vadd.f32 %v159, %v242
    %v244 = vpop.f32.mrb[0].mxu0
    %v245 = vpop.f32.mrb[0].mxu0
    %v246 = vadd.f32 %v159, %v245
    %v247 = vpop.f32.mrb[0].mxu0
    %248 = vdwg.mxu0
    %v249 = vmax.f32 %v243, 0.0
    %v250 = vmax.f32 %v246, 0.0
    %v251 = vpack.c.bf16 %v250, %v249
    %v252 = vlaneseq
    %v253 = vshrl.u32 %v252, 7
    %v254 = vsub.s32 0, %v253
    %v255 = vrot.slane %v92, %v254
    %v272 = vunpack.c.l.b16 %v74
    %v273 = vunpack.c.l.b16 %v75
    %v274 = vunpack.c.l.b16 %v76
    %v275 = vunpack.c.l.b16 %v77
    %v276 = vunpack.c.l.b16 %v78
    %v277 = vunpack.c.l.b16 %v79
    %v278 = vunpack.c.l.b16 %v80
    %v279 = vunpack.c.l.b16 %v81
    %v280 = vunpack.c.l.b16 %v82
    %v281 = vunpack.c.l.b16 %v83
    %v282 = vunpack.c.l.b16 %v84
    %v283 = vunpack.c.l.b16 %v85
    %v284 = vunpack.c.l.b16 %v86
    %v285 = vunpack.c.l.b16 %v87
    %v286 = vunpack.c.l.b16 %v88
    %v287 = vunpack.c.l.b16 %v89
    %v288 = vpack.c.b16 %v273, %v272
    %v289 = vpack.c.b16 %v275, %v274
    %v290 = vpack.c.b16 %v277, %v276
    %v291 = vpack.c.b16 %v279, %v278
    %v292 = vpack.c.b16 %v281, %v280
    %v293 = vpack.c.b16 %v283, %v282
    %v294 = vpack.c.b16 %v285, %v284
    %v295 = vpack.c.b16 %v287, %v286
    %304 = vmatprep.subr.bf16.mxu0 0
    %305 = vmatpush1.bf16.msra.mxu0 %v288
    %306 = vmatprep.subr.bf16.mxu0 0
    %307 = vmatpush1.bf16.msra.mxu0 %v289
    %308 = vmatprep.subr.bf16.mxu0 0
    %309 = vmatpush1.bf16.msra.mxu0 %v290
    %310 = vmatprep.subr.bf16.mxu0 0
    %311 = vmatpush1.bf16.msra.mxu0 %v291
    %312 = vmatprep.subr.bf16.mxu0 0
    %313 = vmatpush1.bf16.msra.mxu0 %v292
    %314 = vmatprep.subr.bf16.mxu0 0
    %315 = vmatpush1.bf16.msra.mxu0 %v293
    %316 = vmatprep.subr.bf16.mxu0 0
    %317 = vmatpush1.bf16.msra.mxu0 %v294
    %318 = vmatprep.subr.bf16.mxu0 0
    %319 = vmatpush1.bf16.msra.mxu0 %v295
    %320 = vmatprep.subr.bf16.mxu0 0
    %321 = vmatpush1.bf16.msra.mxu0 0
    %322 = vmatprep.subr.bf16.mxu0 0
    %323 = vmatpush1.bf16.msra.mxu0 0
    %324 = vmatprep.subr.bf16.mxu0 0
    %325 = vmatpush1.bf16.msra.mxu0 0
    %326 = vmatprep.subr.bf16.mxu0 0
    %327 = vmatpush1.bf16.msra.mxu0 0
    %328 = vmatprep.subr.bf16.mxu0 0
    %329 = vmatpush1.bf16.msra.mxu0 0
    %330 = vmatprep.subr.bf16.mxu0 0
    %331 = vmatpush1.bf16.msra.mxu0 0
    %332 = vmatprep.subr.bf16.mxu0 0
    %333 = vmatpush1.bf16.msra.mxu0 0
    %334 = vmatprep.subr.bf16.mxu0 0
    %335 = vmatpush1.bf16.msra.mxu0 0
    %336 = vmatprep.mubr.bf16.mxu0 0
    %337 = vmatmul.mubr.bf16.gmra.mrb[0].mxu0 %v251
    %v338 = vpop.f32.mrb[0].mxu0
    %v339 = vadd.f32 %v255, %v338
    %v340 = vpop.f32.mrb[0].mxu0
    %v341 = vpop.f32.mrb[0].mxu0
    %v342 = vadd.f32 %v255, %v341
    %v343 = vpop.f32.mrb[0].mxu0
    %344 = vdwg.mxu0
    %v345 = vtanh.pop %v339
    %v346 = vtanh.pop %v342
    %v347 = vmul.f32 %v345, 2.0
    %v348 = vmul.f32 %v346, 2.0
    %vm349 = vcmask 31744
    %350 = vst.msk [vmem:[%s3] sm:$0xff] %vm349, %v347
    %351 = vst.msk [vmem:[%s3 + $0x8] sm:$0xff] %vm349, %v348
    // Predicated region
    $region26: #{tpu_custom_call.1} parent=1 // pred_check
      _
    $region27: #{tpu_custom_call.1} parent=1 // pred_check_branch
      %353 = sbr.rel (0) target = $region29
    $region28: #{tpu_custom_call.1} parent=1 // pred_region
      _
    $region29: #{tpu_custom_call.1} parent=1 // pred_fallthru
      _
    // Predicated region
    $region30: #{tpu_custom_call.1} parent=1 // pred_check
      _
    $region31: #{tpu_custom_call.1} parent=1 // pred_check_branch
      %355 = sbr.rel (0) target = $region33
    $region32: #{tpu_custom_call.1} parent=1 // pred_region
      _
    $region33: #{tpu_custom_call.1} parent=1 // pred_fallthru
      _
    %356 = vsyncpa [#allocation3], 1
    %357 = vsyncpa [#allocation5], 1

</llo_original>
